<compile_context>
chip_gen: v5e
topology: v5e:2x2
jax: 0.10.0
libtpu: 0.0.40
codegen_flags: <defaults>
</compile_context>

<pallas_src>
import functools

import jax
import jax.numpy as jnp
from jax.experimental import pallas as pl
from jax.experimental.pallas import tpu as pltpu


_LANE = 128
_SMALL_NP_MAX = 512          # at/below this the whole problem fits VMEM -> fused kernel


def _round_up(x, m):
    return (x + m - 1) // m * m


def _padded_n(n):
    np_ = _round_up(n, _LANE)
    if np_ <= _SMALL_NP_MAX:
        return np_
    return _round_up(n, 512)   # tiled path wants 512-divisible node count


def _pad2(x, rows, cols):
    return jnp.pad(x, ((0, rows - x.shape[0]), (0, cols - x.shape[1])))


# ------------------------------------------------------------------
# One-time graph preparation (outside the jitted step): pad + bf16.
# ------------------------------------------------------------------
def prepare_graph(graph):
    n = graph.shape[0]
    np_ = _padded_n(n)
    return _pad2(graph.astype(jnp.float32), np_, np_).astype(jnp.bfloat16)


# ------------------------------------------------------------------
# Packed edge-dropout keep mask: one int8 plane, bit0=dual, bit1=plain.
# torch dropout_type==0 keeps an edge with probability keep_prob; here
# each branch uses an independent 16-bit field of one uint32 draw.
# ------------------------------------------------------------------
def make_packed_edge_mask(rng, n_padded, keep_prob):
    thr = jnp.uint32(int(round(keep_prob * 65536.0)))
    bits = jax.random.bits(rng, (n_padded, n_padded), dtype=jnp.uint32)
    keep_dual = (bits & 0xFFFF) < thr
    keep_plain = (bits >> 16) < thr
    return keep_dual.astype(jnp.int8) + 2 * keep_plain.astype(jnp.int8)


# ------------------------------------------------------------------
# Kernel A (small graphs): all n_layers fused in one pallas_call.
#   out = mean over layers of  (1/keep_prob)^l * (G*mask)^l @ e0,  both branches.
# ------------------------------------------------------------------
def _fused_layers_kernel(g_ref, m_ref, e_ref, o_ref, *, inv_keep, dp, n_layers):
    g = g_ref[...]                                   # (Np, Np) bf16 graph
    m = m_ref[...].astype(jnp.int32)                 # packed int8 keep mask
    zero = jnp.zeros((), g.dtype)
    g_dual = jnp.where((m & 1) != 0, g, zero)        # per-branch edge dropout
    g_plain = jnp.where((m & 2) != 0, g, zero)

    cur_d = e_ref[:, :dp]                            # layer-0 embeddings, f32
    cur_p = e_ref[:, dp:]
    acc_d = cur_d
    acc_p = cur_p
    for _ in range(n_layers):                        # static unroll, all in VMEM
        cur_d = inv_keep * jnp.dot(g_dual, cur_d.astype(jnp.bfloat16),
                                   preferred_element_type=jnp.float32)
        cur_p = inv_keep * jnp.dot(g_plain, cur_p.astype(jnp.bfloat16),
                                   preferred_element_type=jnp.float32)
        acc_d = acc_d + cur_d
        acc_p = acc_p + cur_p
    scale = 1.0 / float(n_layers + 1)
    o_ref[:, :dp] = acc_d * scale
    o_ref[:, dp:] = acc_p * scale


def _make_fused_small(np_, dp, n_layers, keep_prob):
    kernel = functools.partial(_fused_layers_kernel, inv_keep=1.0 / float(keep_prob),
                               dp=dp, n_layers=n_layers)
    return pl.pallas_call(
        kernel,
        out_shape=jax.ShapeDtypeStruct((np_, 2 * dp), jnp.float32),
        grid=(1,),
        in_specs=[
            pl.BlockSpec((np_, np_), lambda i: (0, 0)),       # bf16 graph
            pl.BlockSpec((np_, np_), lambda i: (0, 0)),       # int8 packed mask
            pl.BlockSpec((np_, 2 * dp), lambda i: (0, 0)),    # f32 layer-0 embeds
        ],
        out_specs=pl.BlockSpec((np_, 2 * dp), lambda i: (0, 0)),
        compiler_params=pltpu.CompilerParams(
            dimension_semantics=("arbitrary",)),
    )


# ------------------------------------------------------------------
# Kernel B (large graphs): one LightGCN layer, tiled, both branches fused.
#   grid = (Np//tm, Np//tk); k (reduction) last; f32 scratch accumulator;
#   bf16 writeback so the next layer re-reads a half-width RHS.
# ------------------------------------------------------------------
def _prop_layer_kernel(g_ref, m_ref, e_ref, o_ref, acc_ref, *, inv_keep, dp):
    k = pl.program_id(1)

    @pl.when(k == 0)
    def _init():
        acc_ref[...] = jnp.zeros_like(acc_ref)

    g = g_ref[...]                                   # (tm, tk) bf16 graph tile
    m = m_ref[...].astype(jnp.int32)                 # packed keep mask tile
    zero = jnp.zeros((), g.dtype)
    g_dual = jnp.where((m & 1) != 0, g, zero)
    g_plain = jnp.where((m & 2) != 0, g, zero)
    e = e_ref[...]                                   # (tk, 2*dp) bf16 embeddings

    acc_ref[:, :dp] += jnp.dot(g_dual, e[:, :dp], preferred_element_type=jnp.float32)
    acc_ref[:, dp:] += jnp.dot(g_plain, e[:, dp:], preferred_element_type=jnp.float32)

    @pl.when(k == pl.num_programs(1) - 1)
    def _finalize():
        # 1/keep_prob rescale applied to the (tm, 2*dp) result, not the N^2 graph.
        o_ref[...] = (acc_ref[...] * inv_keep).astype(o_ref.dtype)


def _pick_tiles(np_):
    tm = _LANE
    for c in (1024, 512, 256, 128):
        if np_ % c == 0 and np_ // c >= 2:   # >=2 row tiles keeps both v7x TCs busy
            tm = c
            break
    tk = _LANE
    for c in (1024, 512, 256, 128):
        if np_ % c == 0:
            tk = c
            break
    return tm, tk


def _make_prop_layer(np_, dp, tm, tk, keep_prob):
    kernel = functools.partial(_prop_layer_kernel, inv_keep=1.0 / float(keep_prob), dp=dp)
    return pl.pallas_call(
        kernel,
        out_shape=jax.ShapeDtypeStruct((np_, 2 * dp), jnp.bfloat16),
        grid=(np_ // tm, np_ // tk),
        in_specs=[
            pl.BlockSpec((tm, tk), lambda i, k: (i, k)),       # bf16 graph tile
            pl.BlockSpec((tm, tk), lambda i, k: (i, k)),       # int8 packed mask
            pl.BlockSpec((tk, 2 * dp), lambda i, k: (k, 0)),   # bf16 embeddings
        ],
        out_specs=pl.BlockSpec((tm, 2 * dp), lambda i, k: (i, 0)),
        scratch_shapes=[pltpu.VMEM((tm, 2 * dp), jnp.float32)],
        compiler_params=pltpu.CompilerParams(
            dimension_semantics=("parallel", "arbitrary"),
            vmem_limit_bytes=48 * 1024 * 1024,    # safe on v7x's 64 MiB VMEM
        ),
    )


# ------------------------------------------------------------------
# LightGCN propagation with per-branch edge dropout, dual|plain fused so the
# graph is streamed once per layer. Returns layer-mean (N, D) for (dual, plain).
# `graph_pad` must come from prepare_graph(); `packed_mask` from
# make_packed_edge_mask() at the same padded size.
# ------------------------------------------------------------------
def lightgcn_propagate(graph_pad, packed_mask, emb_dual, emb_plain, *,
                       n_layers, keep_prob):
    n, d = emb_dual.shape
    np_ = graph_pad.shape[0]
    dp = _round_up(d, _LANE)

    e = jnp.concatenate(
        [_pad2(emb_dual.astype(jnp.float32), np_, dp),
         _pad2(emb_plain.astype(jnp.float32), np_, dp)], axis=1)

    if np_ <= _SMALL_NP_MAX:
        light = _make_fused_small(np_, dp, n_layers, keep_prob)(
            graph_pad, packed_mask, e)
    else:
        tm, tk = _pick_tiles(np_)
        prop = _make_prop_layer(np_, dp, tm, tk, keep_prob)
        acc = e                                   # f32 layer-mean accumulator
        cur = e.astype(jnp.bfloat16)
        for _ in range(n_layers):                 # one tiled pallas_call per layer
            cur = prop(graph_pad, packed_mask, cur)
            acc = acc + cur.astype(jnp.float32)
        light = acc * (1.0 / float(n_layers + 1))

    return light[:n, :d], light[:n, dp:dp + d]


# Pure-f32 XLA reference of the same math (identical masks), for validation.
def reference_propagate(graph, packed_mask, emb_dual, emb_plain, *, n_layers, keep_prob):
    n, d = emb_dual.shape
    np_ = packed_mask.shape[0]
    g = _pad2(graph.astype(jnp.float32), np_, np_)
    inv = 1.0 / float(keep_prob)
    gd = jnp.where((packed_mask & 1) != 0, g, 0.0) * inv
    gp = jnp.where((packed_mask & 2) != 0, g, 0.0) * inv

    def run(gm, e0):
        cur = jnp.pad(e0.astype(jnp.float32), ((0, np_ - n), (0, 0)))
        acc = cur
        for _ in range(n_layers):
            cur = gm @ cur
            acc = acc + cur
        return (acc * (1.0 / float(n_layers + 1)))[:n]

    return run(gd, emb_dual), run(gp, emb_plain)


# ------------------------------------------------------------------
# BPR loss + L2 regularizer: plain XLA (pallas launch overhead exceeds the
# compute at B=8, D=32).
# ------------------------------------------------------------------
def _branch_losses(light_out, emb0_user, emb0_item, users, pos_items, neg_items,
                   n_users, batch_size):
    all_users = light_out[:n_users]
    all_items = light_out[n_users:]
    ue = jnp.take(all_users, users, axis=0)
    pe = jnp.take(all_items, pos_items, axis=0)
    ne = jnp.take(all_items, neg_items, axis=0)    # .squeeze() is a no-op (1-D idx)

    pos_scores = jnp.sum(ue * pe, axis=1)
    neg_scores = jnp.sum(ue * ne, axis=1)
    maxi = jnp.log(jax.nn.sigmoid(pos_scores - neg_scores) + 1e-10)
    mf = -jnp.mean(maxi)

    u0 = jnp.take(emb0_user, users, axis=0)
    p0 = jnp.take(emb0_item, pos_items, axis=0)
    n0 = jnp.take(emb0_item, neg_items, axis=0)
    reg = 0.5 * (jnp.sum(u0 * u0) + jnp.sum(p0 * p0) + jnp.sum(n0 * n0))
    return mf, reg / float(batch_size)


# ------------------------------------------------------------------
# ADV_DROP forward (dual + plain branches)
# ------------------------------------------------------------------
@functools.partial(jax.jit,
                   static_argnames=("n_layers", "keep_prob", "decay", "batch_size"))
def adv_drop_forward(params, graph_pad, users, pos_items, neg_items, rng, *,
                     n_layers, keep_prob, decay, batch_size):
    n_users = params["embed_user"].shape[0]

    emb_dual = jnp.concatenate(
        [params["embed_user_dual"], params["embed_item_dual"]], axis=0)
    emb_plain = jnp.concatenate(
        [params["embed_user"], params["embed_item"]], axis=0)

    # One packed int8 keep-mask plane, reused bit-identically by every layer.
    packed_mask = make_packed_edge_mask(rng, graph_pad.shape[0], keep_prob)

    light_dual, light_plain = lightgcn_propagate(
        graph_pad, packed_mask, emb_dual, emb_plain,
        n_layers=n_layers, keep_prob=keep_prob)

    mf_d, reg_d = _branch_losses(light_dual, params["embed_user_dual"],
                                 params["embed_item_dual"], users, pos_items,
                                 neg_items, n_users, batch_size)
    mf_p, reg_p = _branch_losses(light_plain, params["embed_user"],
                                 params["embed_item"], users, pos_items,
                                 neg_items, n_users, batch_size)

    mf_loss = mf_d + mf_p
    reg_loss = decay * (reg_d + reg_p)

    # TODO(synk): Inv_Loss_Embed / Mask_Model_Attention are not provided in the
    # reference source; inv_loss is returned as 0 and the dropout_type==1
    # (learned-mask) and use_attribute paths are not implemented.
    inv_loss = jnp.float32(0.0)
    return mf_loss, reg_loss, inv_loss


# ------------------------------------------------------------------
# Deterministic parameter / graph construction + demo
# ------------------------------------------------------------------
def xavier_normal(key, shape):
    fan_out, fan_in = shape
    std = (2.0 / (fan_in + fan_out)) ** 0.5
    return std * jax.random.normal(key, shape, dtype=jnp.float32)


def build_norm_adj(key, n_users, n_items):
    R = jax.random.bernoulli(key, p=0.2, shape=(n_users, n_items)).astype(jnp.float32)
    N = n_users + n_items
    A = jnp.zeros((N, N), dtype=jnp.float32)
    A = A.at[:n_users, n_users:].set(R)
    A = A.at[n_users:, :n_users].set(R.T)
    deg = jnp.sum(A, axis=1)
    d_inv_sqrt = jnp.where(deg > 0, 1.0 / jnp.sqrt(deg), 0.0)
    return d_inv_sqrt[:, None] * A * d_inv_sqrt[None, :]


def _max_abs_diff(a, b):
    return float(jnp.max(jnp.abs(a.astype(jnp.float32) - b.astype(jnp.float32))))


if __name__ == "__main__":
    n_users, n_items, emb_dim = 24, 40, 32
    n_layers, keep_prob = 2, 0.8
    batch_size, decay = 8, 1e-4

    root = jax.random.PRNGKey(0)
    k_eu, k_ei, k_eud, k_eid, k_g, k_u, k_p, k_n, k_drop = jax.random.split(root, 9)

    params = {
        "embed_user": xavier_normal(k_eu, (n_users, emb_dim)),
        "embed_item": xavier_normal(k_ei, (n_items, emb_dim)),
        "embed_user_dual": xavier_normal(k_eud, (n_users, emb_dim)),
        "embed_item_dual": xavier_normal(k_eid, (n_items, emb_dim)),
    }
    graph = build_norm_adj(k_g, n_users, n_items)
    graph_pad = prepare_graph(graph)           # pad + bf16 once, outside the step

    users = jax.random.randint(k_u, (batch_size,), 0, n_users, dtype=jnp.int32)
    pos_items = jax.random.randint(k_p, (batch_size,), 0, n_items, dtype=jnp.int32)
    neg_items = jax.random.randint(k_n, (batch_size,), 0, n_items, dtype=jnp.int32)

    mf_loss, reg_loss, inv_loss = adv_drop_forward(
        params, graph_pad, users, pos_items, neg_items, k_drop,
        n_layers=n_layers, keep_prob=keep_prob, decay=decay, batch_size=batch_size,
    )
    jax.block_until_ready((mf_loss, reg_loss, inv_loss))

    # -- validate fused small-graph kernel against a pure-f32 reference --------
    emb_dual = jnp.concatenate([params["embed_user_dual"], params["embed_item_dual"]], 0)
    emb_plain = jnp.concatenate([params["embed_user"], params["embed_item"]], 0)
    packed = make_packed_edge_mask(k_drop, graph_pad.shape[0], keep_prob)
    kd, kp = lightgcn_propagate(graph_pad, packed, emb_dual, emb_plain,
                                n_layers=n_layers, keep_prob=keep_prob)
    rd, rp = reference_propagate(graph, packed, emb_dual, emb_plain,
                                 n_layers=n_layers, keep_prob=keep_prob)
    err_small = max(_max_abs_diff(kd, rd), _max_abs_diff(kp, rp))
    assert err_small < 5e-2, f"small-path mismatch: {err_small}"

    # -- also exercise the tiled large-graph path (multi-tile grid, k-accum) ---
    k2_g, k2_d, k2_p, k2_m = jax.random.split(jax.random.PRNGKey(1), 4)
    nu2, ni2 = 600, 600                        # N=1200 -> Np=1536, grid (3, 3)
    graph2 = build_norm_adj(k2_g, nu2, ni2)
    graph2_pad = prepare_graph(graph2)
    e2_dual = xavier_normal(k2_d, (nu2 + ni2, emb_dim))
    e2_plain = xavier_normal(k2_p, (nu2 + ni2, emb_dim))
    packed2 = make_packed_edge_mask(k2_m, graph2_pad.shape[0], keep_prob)
    kd2, kp2 = lightgcn_propagate(graph2_pad, packed2, e2_dual, e2_plain,
                                  n_layers=n_layers, keep_prob=keep_prob)
    rd2, rp2 = reference_propagate(graph2, packed2, e2_dual, e2_plain,
                                   n_layers=n_layers, keep_prob=keep_prob)
    err_big = max(_max_abs_diff(kd2, rd2), _max_abs_diff(kp2, rp2))
    assert err_big < 5e-2, f"tiled-path mismatch: {err_big}"

    jax.block_until_ready((kd, kd2))
    print("KERNEL_OK")
</pallas_src>

<mosaic_0001>
module attributes {stable_mosaic.version = 11 : i64} {
  func.func @_fused_layers_kernel(%arg0: i32, %arg1: memref<128x128xbf16, #tpu.memory_space<vmem>>, %arg2: memref<128x128xi8, #tpu.memory_space<vmem>>, %arg3: memref<128x256xf32, #tpu.memory_space<vmem>>, %arg4: memref<128x256xf32, #tpu.memory_space<vmem>>) attributes {dimension_semantics = [#tpu.dimension_semantics<arbitrary>], iteration_bounds = array<i64: 1>, scalar_prefetch = 0 : i64, scratch_operands = 0 : i64, tpu.core_type = #tpu.core_type<tc>, window_params = [{pipeline_mode = #tpu.pipeline_mode<synchronous>, transform_indices = @transform_0, window_bounds = array<i64: 128, 128>}, {pipeline_mode = #tpu.pipeline_mode<synchronous>, transform_indices = @transform_1, window_bounds = array<i64: 128, 128>}, {pipeline_mode = #tpu.pipeline_mode<synchronous>, transform_indices = @transform_2, window_bounds = array<i64: 128, 256>}, {pipeline_mode = #tpu.pipeline_mode<synchronous>, transform_indices = @transform_3, window_bounds = array<i64: 128, 256>}]} {
    %c0 = arith.constant 0 : index
    %c0_0 = arith.constant 0 : index
    %0 = vector.load %arg1[%c0, %c0_0] : memref<128x128xbf16, #tpu.memory_space<vmem>>, vector<128x128xbf16>
    %c0_1 = arith.constant 0 : index
    %c0_2 = arith.constant 0 : index
    %1 = vector.load %arg2[%c0_1, %c0_2] : memref<128x128xi8, #tpu.memory_space<vmem>>, vector<128x128xi8>
    %2 = arith.extsi %1 : vector<128x128xi8> to vector<128x128xi32>
    %c1_i32 = arith.constant 1 : i32
    %3 = vector.broadcast %c1_i32 : i32 to vector<128x128xi32>
    %4 = arith.andi %2, %3 : vector<128x128xi32>
    %c0_i32 = arith.constant 0 : i32
    %5 = vector.broadcast %c0_i32 : i32 to vector<128x128xi32>
    %6 = arith.cmpi ne, %4, %5 : vector<128x128xi32>
    %cst = arith.constant 0.000000e+00 : bf16
    %7 = vector.broadcast %cst : bf16 to vector<128x128xbf16>
    %8 = arith.select %6, %0, %7 : vector<128x128xi1>, vector<128x128xbf16>
    %c2_i32 = arith.constant 2 : i32
    %9 = vector.broadcast %c2_i32 : i32 to vector<128x128xi32>
    %10 = arith.andi %2, %9 : vector<128x128xi32>
    %c0_i32_3 = arith.constant 0 : i32
    %11 = vector.broadcast %c0_i32_3 : i32 to vector<128x128xi32>
    %12 = arith.cmpi ne, %10, %11 : vector<128x128xi32>
    %cst_4 = arith.constant 0.000000e+00 : bf16
    %13 = vector.broadcast %cst_4 : bf16 to vector<128x128xbf16>
    %14 = arith.select %12, %0, %13 : vector<128x128xi1>, vector<128x128xbf16>
    %c0_5 = arith.constant 0 : index
    %c0_6 = arith.constant 0 : index
    %15 = vector.load %arg3[%c0_5, %c0_6] : memref<128x256xf32, #tpu.memory_space<vmem>>, vector<128x128xf32>
    %c0_7 = arith.constant 0 : index
    %c128 = arith.constant 128 : index
    %16 = vector.load %arg3[%c0_7, %c128] : memref<128x256xf32, #tpu.memory_space<vmem>>, vector<128x128xf32>
    %17 = arith.truncf %15 : vector<128x128xf32> to vector<128x128xbf16>
    %cst_8 = arith.constant dense<0.000000e+00> : vector<128x128xf32>
    %18 = tpu.matmul %8, %17, %cst_8 {dimension_numbers = #tpu.dot_dimension_numbers<[1], [0], [0], [1], [0, 0, 1, 1], [], []>} : vector<128x128xbf16>, vector<128x128xbf16>, vector<128x128xf32> -> vector<128x128xf32>
    %cst_9 = arith.constant 1.250000e+00 : f32
    %19 = vector.broadcast %cst_9 : f32 to vector<128x128xf32>
    %20 = arith.mulf %19, %18 : vector<128x128xf32>
    %21 = arith.truncf %16 : vector<128x128xf32> to vector<128x128xbf16>
    %cst_10 = arith.constant dense<0.000000e+00> : vector<128x128xf32>
    %22 = tpu.matmul %14, %21, %cst_10 {dimension_numbers = #tpu.dot_dimension_numbers<[1], [0], [0], [1], [0, 0, 1, 1], [], []>} : vector<128x128xbf16>, vector<128x128xbf16>, vector<128x128xf32> -> vector<128x128xf32>
    %cst_11 = arith.constant 1.250000e+00 : f32
    %23 = vector.broadcast %cst_11 : f32 to vector<128x128xf32>
    %24 = arith.mulf %23, %22 : vector<128x128xf32>
    %25 = arith.addf %15, %20 : vector<128x128xf32>
    %26 = arith.addf %16, %24 : vector<128x128xf32>
    %27 = arith.truncf %20 : vector<128x128xf32> to vector<128x128xbf16>
    %cst_12 = arith.constant dense<0.000000e+00> : vector<128x128xf32>
    %28 = tpu.matmul %8, %27, %cst_12 {dimension_numbers = #tpu.dot_dimension_numbers<[1], [0], [0], [1], [0, 0, 1, 1], [], []>} : vector<128x128xbf16>, vector<128x128xbf16>, vector<128x128xf32> -> vector<128x128xf32>
    %cst_13 = arith.constant 1.250000e+00 : f32
    %29 = vector.broadcast %cst_13 : f32 to vector<128x128xf32>
    %30 = arith.mulf %29, %28 : vector<128x128xf32>
    %31 = arith.truncf %24 : vector<128x128xf32> to vector<128x128xbf16>
    %cst_14 = arith.constant dense<0.000000e+00> : vector<128x128xf32>
    %32 = tpu.matmul %14, %31, %cst_14 {dimension_numbers = #tpu.dot_dimension_numbers<[1], [0], [0], [1], [0, 0, 1, 1], [], []>} : vector<128x128xbf16>, vector<128x128xbf16>, vector<128x128xf32> -> vector<128x128xf32>
    %cst_15 = arith.constant 1.250000e+00 : f32
    %33 = vector.broadcast %cst_15 : f32 to vector<128x128xf32>
    %34 = arith.mulf %33, %32 : vector<128x128xf32>
    %35 = arith.addf %25, %30 : vector<128x128xf32>
    %36 = arith.addf %26, %34 : vector<128x128xf32>
    %cst_16 = arith.constant 0.333333343 : f32
    %37 = vector.broadcast %cst_16 : f32 to vector<128x128xf32>
    %38 = arith.mulf %35, %37 : vector<128x128xf32>
    %c0_17 = arith.constant 0 : index
    %c0_18 = arith.constant 0 : index
    %39 = vector.load %arg4[%c0_17, %c0_18] : memref<128x256xf32, #tpu.memory_space<vmem>>, vector<128x128xf32>
    tpu.vector_store %arg4[%c0_17, %c0_18], %38 {strides = array<i32>} : memref<128x256xf32, #tpu.memory_space<vmem>>, vector<128x128xf32>,
    %cst_19 = arith.constant 0.333333343 : f32
    %40 = vector.broadcast %cst_19 : f32 to vector<128x128xf32>
    %41 = arith.mulf %36, %40 : vector<128x128xf32>
    %c0_20 = arith.constant 0 : index
    %c128_21 = arith.constant 128 : index
    %42 = vector.load %arg4[%c0_20, %c128_21] : memref<128x256xf32, #tpu.memory_space<vmem>>, vector<128x128xf32>
    tpu.vector_store %arg4[%c0_20, %c128_21], %41 {strides = array<i32>} : memref<128x256xf32, #tpu.memory_space<vmem>>, vector<128x128xf32>,
    return
  }
  func.func @transform_0(%arg0: i32) -> (i32, i32) {
    %c0_i32 = arith.constant 0 : i32
    %c0_i32_0 = arith.constant 0 : i32
    %c0_i32_1 = arith.constant 0 : i32
    return %c0_i32, %c0_i32_0 : i32, i32
  }
  func.func @transform_1(%arg0: i32) -> (i32, i32) {
    %c0_i32 = arith.constant 0 : i32
    %c0_i32_0 = arith.constant 0 : i32
    %c0_i32_1 = arith.constant 0 : i32
    return %c0_i32, %c0_i32_0 : i32, i32
  }
  func.func @transform_2(%arg0: i32) -> (i32, i32) {
    %c0_i32 = arith.constant 0 : i32
    %c0_i32_0 = arith.constant 0 : i32
    %c0_i32_1 = arith.constant 0 : i32
    return %c0_i32, %c0_i32_0 : i32, i32
  }
  func.func @transform_3(%arg0: i32) -> (i32, i32) {
    %c0_i32 = arith.constant 0 : i32
    %c0_i32_0 = arith.constant 0 : i32
    %c0_i32_1 = arith.constant 0 : i32
    return %c0_i32, %c0_i32_0 : i32, i32
  }
}

</mosaic_0001>

<llo_original>
// kernel: adv_drop_forward.1
$region0: #{adv_drop_forward.1}
  #allocation0 [shape = 'u32[]', space=smem, size = 0x4, offset = 0x4, fixed_abs, tag = 'smem constant byte address 0x4 - core index']
  #allocation1 [shape = 'u32[72,128]{1,0:T(1,128)}', space=vmem, size = 0x9000, scoped, tag = 'internal scratch']
  %s0 = inlined_call_operand.vmem [shape: bf16[128,128], index: 0, kind: input, shape index: {}]
  %s1 = inlined_call_operand.vmem [shape: s8[128,128], index: 1, kind: input, shape index: {}]
  %s2 = inlined_call_operand.vmem [shape: f32[128,256], index: 2, kind: input, shape index: {}]
  %s3 = inlined_call_operand.vmem [shape: f32[128,256], index: 3, kind: output, shape index: {}]
  %s4 = sld [smem:[#allocation0]]
  $region22: #{adv_drop_forward.1} parent=0
    _
  %s6 = ssub.s32 1, %s4
  %s7 = scalar_select 0, %s6, %s4
  // Predicated region
  $region2: #{adv_drop_forward.1} parent=0 // pred_check
    _
  $region3: #{adv_drop_forward.1} parent=0 // pred_check_branch
    %9 = sbr.rel (0) target = $region5
  $region4: #{adv_drop_forward.1} parent=0 // pred_region
    _
  $region5: #{adv_drop_forward.1} parent=0 // pred_fallthru
    _
  // Predicated region
  $region6: #{adv_drop_forward.1} parent=0 // pred_check
    _
  $region7: #{adv_drop_forward.1} parent=0 // pred_check_branch
    %11 = sbr.rel (0) target = $region9
  $region8: #{adv_drop_forward.1} parent=0 // pred_region
    _
  $region9: #{adv_drop_forward.1} parent=0 // pred_fallthru
    _
  // Predicated region
  $region10: #{adv_drop_forward.1} parent=0 // pred_check
    _
  $region11: #{adv_drop_forward.1} parent=0 // pred_check_branch
    %13 = sbr.rel (0) target = $region13
  $region12: #{adv_drop_forward.1} parent=0 // pred_region
    _
  $region13: #{adv_drop_forward.1} parent=0 // pred_fallthru
    _
  %v15 = vld [vmem:[%s0] sm:$0xf]
  %v16 = vld [vmem:[%s0 + $0x4] sm:$0xf]
  %v17 = vld [vmem:[%s0 + $0x8] sm:$0xf]
  %v18 = vld [vmem:[%s0 + $0xc] sm:$0xf]
  %v19 = vld [vmem:[%s0 + $0x10] sm:$0xf]
  %v20 = vld [vmem:[%s0 + $0x14] sm:$0xf]
  %v21 = vld [vmem:[%s0 + $0x18] sm:$0xf]
  %v22 = vld [vmem:[%s0 + $0x1c] sm:$0xf]
  %v23 = vld [vmem:[%s0 + $0x20] sm:$0xf]
  %v24 = vld [vmem:[%s0 + $0x24] sm:$0xf]
  %v25 = vld [vmem:[%s0 + $0x28] sm:$0xf]
  %v26 = vld [vmem:[%s0 + $0x2c] sm:$0xf]
  %v27 = vld [vmem:[%s0 + $0x30] sm:$0xf]
  %v28 = vld [vmem:[%s0 + $0x34] sm:$0xf]
  %v29 = vld [vmem:[%s0 + $0x38] sm:$0xf]
  %v30 = vld [vmem:[%s0 + $0x3c] sm:$0xf]
  %v31 = vld [vmem:[%s1] sm:$0xff]
  %v32 = vld [vmem:[%s1 + $0x8] sm:$0xff]
  %v33 = vld [vmem:[%s1 + $0x10] sm:$0xff]
  %v34 = vld [vmem:[%s1 + $0x18] sm:$0xff]
  %v35 = vunpack.c.0.s8 %v31
  %v36 = vunpack.c.1.s8 %v31
  %v37 = vunpack.c.2.s8 %v31
  %v38 = vunpack.c.3.s8 %v31
  %v39 = vunpack.c.0.s8 %v32
  %v40 = vunpack.c.1.s8 %v32
  %v41 = vunpack.c.2.s8 %v32
  %v42 = vunpack.c.3.s8 %v32
  %v43 = vunpack.c.0.s8 %v33
  %v44 = vunpack.c.1.s8 %v33
  %v45 = vunpack.c.2.s8 %v33
  %v46 = vunpack.c.3.s8 %v33
  %v47 = vunpack.c.0.s8 %v34
  %v48 = vunpack.c.1.s8 %v34
  %v49 = vunpack.c.2.s8 %v34
  %v50 = vunpack.c.3.s8 %v34
  %v51 = vand.u32 %v35, 1
  %v52 = vand.u32 %v36, 1
  %v53 = vand.u32 %v37, 1
  %v54 = vand.u32 %v38, 1
  %v55 = vand.u32 %v39, 1
  %v56 = vand.u32 %v40, 1
  %v57 = vand.u32 %v41, 1
  %v58 = vand.u32 %v42, 1
  %v59 = vand.u32 %v43, 1
  %v60 = vand.u32 %v44, 1
  %v61 = vand.u32 %v45, 1
  %v62 = vand.u32 %v46, 1
  %v63 = vand.u32 %v47, 1
  %v64 = vand.u32 %v48, 1
  %v65 = vand.u32 %v49, 1
  %v66 = vand.u32 %v50, 1
  %vm67 = vcmp.ne.s32.totalorder %v51, 0
  %vm68 = vcmp.ne.s32.totalorder %v52, 0
  %vm69 = vcmp.ne.s32.totalorder %v53, 0
  %vm70 = vcmp.ne.s32.totalorder %v54, 0
  %vm71 = vcmp.ne.s32.totalorder %v55, 0
  %vm72 = vcmp.ne.s32.totalorder %v56, 0
  %vm73 = vcmp.ne.s32.totalorder %v57, 0
  %vm74 = vcmp.ne.s32.totalorder %v58, 0
  %vm75 = vcmp.ne.s32.totalorder %v59, 0
  %vm76 = vcmp.ne.s32.totalorder %v60, 0
  %vm77 = vcmp.ne.s32.totalorder %v61, 0
  %vm78 = vcmp.ne.s32.totalorder %v62, 0
  %vm79 = vcmp.ne.s32.totalorder %v63, 0
  %vm80 = vcmp.ne.s32.totalorder %v64, 0
  %vm81 = vcmp.ne.s32.totalorder %v65, 0
  %vm82 = vcmp.ne.s32.totalorder %v66, 0
  %vm83 = vmpackc.low %vm67, %vm67
  %vm84 = vmpackc.low %vm68, %vm68
  %vm85 = vmpackc.low %vm69, %vm69
  %vm86 = vmpackc.low %vm70, %vm70
  %vm87 = vmpackc.low %vm71, %vm71
  %vm88 = vmpackc.low %vm72, %vm72
  %vm89 = vmpackc.low %vm73, %vm73
  %vm90 = vmpackc.low %vm74, %vm74
  %vm91 = vmpackc.low %vm75, %vm75
  %vm92 = vmpackc.low %vm76, %vm76
  %vm93 = vmpackc.low %vm77, %vm77
  %vm94 = vmpackc.low %vm78, %vm78
  %vm95 = vmpackc.low %vm79, %vm79
  %vm96 = vmpackc.low %vm80, %vm80
  %vm97 = vmpackc.low %vm81, %vm81
  %vm98 = vmpackc.low %vm82, %vm82
  %v99 = vsel %vm83, %v15, 0
  %v100 = vsel %vm84, %v16, 0
  %v101 = vsel %vm85, %v17, 0
  %v102 = vsel %vm86, %v18, 0
  %v103 = vsel %vm87, %v19, 0
  %v104 = vsel %vm88, %v20, 0
  %v105 = vsel %vm89, %v21, 0
  %v106 = vsel %vm90, %v22, 0
  %v107 = vsel %vm91, %v23, 0
  %v108 = vsel %vm92, %v24, 0
  %v109 = vsel %vm93, %v25, 0
  %v110 = vsel %vm94, %v26, 0
  %v111 = vsel %vm95, %v27, 0
  %v112 = vsel %vm96, %v28, 0
  %v113 = vsel %vm97, %v29, 0
  %v114 = vsel %vm98, %v30, 0
  %v115 = vand.u32 %v35, 2
  %v116 = vand.u32 %v36, 2
  %v117 = vand.u32 %v37, 2
  %v118 = vand.u32 %v38, 2
  %v119 = vand.u32 %v39, 2
  %v120 = vand.u32 %v40, 2
  %v121 = vand.u32 %v41, 2
  %v122 = vand.u32 %v42, 2
  %v123 = vand.u32 %v43, 2
  %v124 = vand.u32 %v44, 2
  %v125 = vand.u32 %v45, 2
  %v126 = vand.u32 %v46, 2
  %v127 = vand.u32 %v47, 2
  %v128 = vand.u32 %v48, 2
  %v129 = vand.u32 %v49, 2
  %v130 = vand.u32 %v50, 2
  %vm131 = vcmp.ne.s32.totalorder %v115, 0
  %vm132 = vcmp.ne.s32.totalorder %v116, 0
  %vm133 = vcmp.ne.s32.totalorder %v117, 0
  %vm134 = vcmp.ne.s32.totalorder %v118, 0
  %vm135 = vcmp.ne.s32.totalorder %v119, 0
  %vm136 = vcmp.ne.s32.totalorder %v120, 0
  %vm137 = vcmp.ne.s32.totalorder %v121, 0
  %vm138 = vcmp.ne.s32.totalorder %v122, 0
  %vm139 = vcmp.ne.s32.totalorder %v123, 0
  %vm140 = vcmp.ne.s32.totalorder %v124, 0
  %vm141 = vcmp.ne.s32.totalorder %v125, 0
  %vm142 = vcmp.ne.s32.totalorder %v126, 0
  %vm143 = vcmp.ne.s32.totalorder %v127, 0
  %vm144 = vcmp.ne.s32.totalorder %v128, 0
  %vm145 = vcmp.ne.s32.totalorder %v129, 0
  %vm146 = vcmp.ne.s32.totalorder %v130, 0
  %vm147 = vmpackc.low %vm131, %vm131
  %vm148 = vmpackc.low %vm132, %vm132
  %vm149 = vmpackc.low %vm133, %vm133
  %vm150 = vmpackc.low %vm134, %vm134
  %vm151 = vmpackc.low %vm135, %vm135
  %vm152 = vmpackc.low %vm136, %vm136
  %vm153 = vmpackc.low %vm137, %vm137
  %vm154 = vmpackc.low %vm138, %vm138
  %vm155 = vmpackc.low %vm139, %vm139
  %vm156 = vmpackc.low %vm140, %vm140
  %vm157 = vmpackc.low %vm141, %vm141
  %vm158 = vmpackc.low %vm142, %vm142
  %vm159 = vmpackc.low %vm143, %vm143
  %vm160 = vmpackc.low %vm144, %vm144
  %vm161 = vmpackc.low %vm145, %vm145
  %vm162 = vmpackc.low %vm146, %vm146
  %v163 = vsel %vm147, %v15, 0
  %v164 = vsel %vm148, %v16, 0
  %v165 = vsel %vm149, %v17, 0
  %v166 = vsel %vm150, %v18, 0
  %v167 = vsel %vm151, %v19, 0
  %v168 = vsel %vm152, %v20, 0
  %v169 = vsel %vm153, %v21, 0
  %v170 = vsel %vm154, %v22, 0
  %v171 = vsel %vm155, %v23, 0
  %v172 = vsel %vm156, %v24, 0
  %v173 = vsel %vm157, %v25, 0
  %v174 = vsel %vm158, %v26, 0
  %v175 = vsel %vm159, %v27, 0
  %v176 = vsel %vm160, %v28, 0
  %v177 = vsel %vm161, %v29, 0
  %v178 = vsel %vm162, %v30, 0
  %v179 = vld [vmem:[%s2] sm:$0xff]
  %v180 = vld [vmem:[%s2 + $0x10] sm:$0xff]
  %v181 = vld [vmem:[%s2 + $0x20] sm:$0xff]
  %v182 = vld [vmem:[%s2 + $0x30] sm:$0xff]
  %v183 = vld [vmem:[%s2 + $0x40] sm:$0xff]
  %v184 = vld [vmem:[%s2 + $0x50] sm:$0xff]
  %v185 = vld [vmem:[%s2 + $0x60] sm:$0xff]
  %v186 = vld [vmem:[%s2 + $0x70] sm:$0xff]
  %v187 = vld [vmem:[%s2 + $0x80] sm:$0xff]
  %v188 = vld [vmem:[%s2 + $0x90] sm:$0xff]
  %v189 = vld [vmem:[%s2 + $0xa0] sm:$0xff]
  %v190 = vld [vmem:[%s2 + $0xb0] sm:$0xff]
  %v191 = vld [vmem:[%s2 + $0xc0] sm:$0xff]
  %v192 = vld [vmem:[%s2 + $0xd0] sm:$0xff]
  %v193 = vld [vmem:[%s2 + $0xe0] sm:$0xff]
  %v194 = vld [vmem:[%s2 + $0xf0] sm:$0xff]
  %v195 = vld [vmem:[%s2 + $0x8] sm:$0xff]
  %v196 = vld [vmem:[%s2 + $0x18] sm:$0xff]
  %v197 = vld [vmem:[%s2 + $0x28] sm:$0xff]
  %v198 = vld [vmem:[%s2 + $0x38] sm:$0xff]
  %v199 = vld [vmem:[%s2 + $0x48] sm:$0xff]
  %v200 = vld [vmem:[%s2 + $0x58] sm:$0xff]
  %v201 = vld [vmem:[%s2 + $0x68] sm:$0xff]
  %v202 = vld [vmem:[%s2 + $0x78] sm:$0xff]
  %v203 = vld [vmem:[%s2 + $0x88] sm:$0xff]
  %v204 = vld [vmem:[%s2 + $0x98] sm:$0xff]
  %v205 = vld [vmem:[%s2 + $0xa8] sm:$0xff]
  %v206 = vld [vmem:[%s2 + $0xb8] sm:$0xff]
  %v207 = vld [vmem:[%s2 + $0xc8] sm:$0xff]
  %v208 = vld [vmem:[%s2 + $0xd8] sm:$0xff]
  %v209 = vld [vmem:[%s2 + $0xe8] sm:$0xff]
  %v210 = vld [vmem:[%s2 + $0xf8] sm:$0xff]
  %v211 = vpack.c.bf16 %v180, %v179
  %v212 = vpack.c.bf16 %v182, %v181
  %v213 = vpack.c.bf16 %v184, %v183
  %v214 = vpack.c.bf16 %v186, %v185
  %v215 = vpack.c.bf16 %v188, %v187
  %v216 = vpack.c.bf16 %v190, %v189
  %v217 = vpack.c.bf16 %v192, %v191
  %v218 = vpack.c.bf16 %v194, %v193
  %v235 = vunpack.c.l.b16 %v99
  %v236 = vunpack.c.l.b16 %v100
  %v237 = vunpack.c.l.b16 %v101
  %v238 = vunpack.c.l.b16 %v102
  %v239 = vunpack.c.l.b16 %v103
  %v240 = vunpack.c.l.b16 %v104
  %v241 = vunpack.c.l.b16 %v105
  %v242 = vunpack.c.l.b16 %v106
  %v243 = vunpack.c.l.b16 %v107
  %v244 = vunpack.c.l.b16 %v108
  %v245 = vunpack.c.l.b16 %v109
  %v246 = vunpack.c.l.b16 %v110
  %v247 = vunpack.c.l.b16 %v111
  %v248 = vunpack.c.l.b16 %v112
  %v249 = vunpack.c.l.b16 %v113
  %v250 = vunpack.c.l.b16 %v114
  %v251 = vpack.c.b16 %v236, %v235
  %v252 = vpack.c.b16 %v238, %v237
  %v253 = vpack.c.b16 %v240, %v239
  %v254 = vpack.c.b16 %v242, %v241
  %v255 = vpack.c.b16 %v244, %v243
  %v256 = vpack.c.b16 %v246, %v245
  %v257 = vpack.c.b16 %v248, %v247
  %v258 = vpack.c.b16 %v250, %v249
  %267 = vmatpush.bf16.msra.mxu0 %v218
  %268 = vmatpush.bf16.msra.mxu0 %v217
  %269 = vmatpush.bf16.msra.mxu0 %v216
  %270 = vmatpush.bf16.msra.mxu0 %v215
  %271 = vmatpush.bf16.msra.mxu0 %v214
  %272 = vmatpush.bf16.msra.mxu0 %v213
  %273 = vmatpush.bf16.msra.mxu0 %v212
  %274 = vmatpush.bf16.msra.mxu0 %v211
  %275 = vmatmul.bf16.gmra.mxu0 %v251
  %v276 = vpop.f32.mrf.mxu0
  %v277 = vadd.f32 0.0, %v276
  %v278 = vpop.f32.mrf.mxu0
  %v279 = vadd.f32 0.0, %v278
  %280 = vmatmul.bf16.gmra.mxu0 %v252
  %v281 = vpop.f32.mrf.mxu0
  %v282 = vadd.f32 0.0, %v281
  %v283 = vpop.f32.mrf.mxu0
  %v284 = vadd.f32 0.0, %v283
  %285 = vmatmul.bf16.gmra.mxu0 %v253
  %v286 = vpop.f32.mrf.mxu0
  %v287 = vadd.f32 0.0, %v286
  %v288 = vpop.f32.mrf.mxu0
  %v289 = vadd.f32 0.0, %v288
  %290 = vmatmul.bf16.gmra.mxu0 %v254
  %v291 = vpop.f32.mrf.mxu0
  %v292 = vadd.f32 0.0, %v291
  %v293 = vpop.f32.mrf.mxu0
  %v294 = vadd.f32 0.0, %v293
  %295 = vmatmul.bf16.gmra.mxu0 %v255
  %v296 = vpop.f32.mrf.mxu0
  %v297 = vadd.f32 0.0, %v296
  %v298 = vpop.f32.mrf.mxu0
  %v299 = vadd.f32 0.0, %v298
  %300 = vmatmul.bf16.gmra.mxu0 %v256
  %v301 = vpop.f32.mrf.mxu0
  %v302 = vadd.f32 0.0, %v301
  %v303 = vpop.f32.mrf.mxu0
  %v304 = vadd.f32 0.0, %v303
  %305 = vmatmul.bf16.gmra.mxu0 %v257
  %v306 = vpop.f32.mrf.mxu0
  %v307 = vadd.f32 0.0, %v306
  %v308 = vpop.f32.mrf.mxu0
  %v309 = vadd.f32 0.0, %v308
  %310 = vmatmul.bf16.gmra.mxu0 %v258
  %v311 = vpop.f32.mrf.mxu0
  %v312 = vadd.f32 0.0, %v311
  %v313 = vpop.f32.mrf.mxu0
  %v314 = vadd.f32 0.0, %v313
  %315 = vdwg.mxu0
  %v316 = vmul.f32 %v277, 1.25
  %v317 = vmul.f32 %v279, 1.25
  %v318 = vmul.f32 %v282, 1.25
  %v319 = vmul.f32 %v284, 1.25
  %v320 = vmul.f32 %v287, 1.25
  %v321 = vmul.f32 %v289, 1.25
  %v322 = vmul.f32 %v292, 1.25
  %v323 = vmul.f32 %v294, 1.25
  %v324 = vmul.f32 %v297, 1.25
  %v325 = vmul.f32 %v299, 1.25
  %v326 = vmul.f32 %v302, 1.25
  %v327 = vmul.f32 %v304, 1.25
  %v328 = vmul.f32 %v307, 1.25
  %v329 = vmul.f32 %v309, 1.25
  %v330 = vmul.f32 %v312, 1.25
  %v331 = vmul.f32 %v314, 1.25
  %v332 = vpack.c.bf16 %v196, %v195
  %v333 = vpack.c.bf16 %v198, %v197
  %v334 = vpack.c.bf16 %v200, %v199
  %v335 = vpack.c.bf16 %v202, %v201
  %v336 = vpack.c.bf16 %v204, %v203
  %v337 = vpack.c.bf16 %v206, %v205
  %v338 = vpack.c.bf16 %v208, %v207
  %v339 = vpack.c.bf16 %v210, %v209
  %v356 = vunpack.c.l.b16 %v163
  %v357 = vunpack.c.l.b16 %v164
  %v358 = vunpack.c.l.b16 %v165
  %v359 = vunpack.c.l.b16 %v166
  %v360 = vunpack.c.l.b16 %v167
  %v361 = vunpack.c.l.b16 %v168
  %v362 = vunpack.c.l.b16 %v169
  %v363 = vunpack.c.l.b16 %v170
  %v364 = vunpack.c.l.b16 %v171
  %v365 = vunpack.c.l.b16 %v172
  %v366 = vunpack.c.l.b16 %v173
  %v367 = vunpack.c.l.b16 %v174
  %v368 = vunpack.c.l.b16 %v175
  %v369 = vunpack.c.l.b16 %v176
  %v370 = vunpack.c.l.b16 %v177
  %v371 = vunpack.c.l.b16 %v178
  %v372 = vpack.c.b16 %v357, %v356
  %v373 = vpack.c.b16 %v359, %v358
  %v374 = vpack.c.b16 %v361, %v360
  %v375 = vpack.c.b16 %v363, %v362
  %v376 = vpack.c.b16 %v365, %v364
  %v377 = vpack.c.b16 %v367, %v366
  %v378 = vpack.c.b16 %v369, %v368
  %v379 = vpack.c.b16 %v371, %v370
  %388 = vmatpush.bf16.msra.mxu0 %v339
  %389 = vmatpush.bf16.msra.mxu0 %v338
  %390 = vmatpush.bf16.msra.mxu0 %v337
  %391 = vmatpush.bf16.msra.mxu0 %v336
  %392 = vmatpush.bf16.msra.mxu0 %v335
  %393 = vmatpush.bf16.msra.mxu0 %v334
  %394 = vmatpush.bf16.msra.mxu0 %v333
  %395 = vmatpush.bf16.msra.mxu0 %v332
  %396 = vmatmul.bf16.gmra.mxu0 %v372
  %v397 = vpop.f32.mrf.mxu0
  %v398 = vadd.f32 0.0, %v397
  %v399 = vpop.f32.mrf.mxu0
  %v400 = vadd.f32 0.0, %v399
  %401 = vmatmul.bf16.gmra.mxu0 %v373
  %v402 = vpop.f32.mrf.mxu0
  %v403 = vadd.f32 0.0, %v402
  %v404 = vpop.f32.mrf.mxu0
  %v405 = vadd.f32 0.0, %v404
  %406 = vmatmul.bf16.gmra.mxu0 %v374
  %v407 = vpop.f32.mrf.mxu0
  %v408 = vadd.f32 0.0, %v407
  %v409 = vpop.f32.mrf.mxu0
  %v410 = vadd.f32 0.0, %v409
  %411 = vmatmul.bf16.gmra.mxu0 %v375
  %v412 = vpop.f32.mrf.mxu0
  %v413 = vadd.f32 0.0, %v412
  %v414 = vpop.f32.mrf.mxu0
  %v415 = vadd.f32 0.0, %v414
  %416 = vmatmul.bf16.gmra.mxu0 %v376
  %v417 = vpop.f32.mrf.mxu0
  %v418 = vadd.f32 0.0, %v417
  %v419 = vpop.f32.mrf.mxu0
  %v420 = vadd.f32 0.0, %v419
  %421 = vmatmul.bf16.gmra.mxu0 %v377
  %v422 = vpop.f32.mrf.mxu0
  %v423 = vadd.f32 0.0, %v422
  %v424 = vpop.f32.mrf.mxu0
  %v425 = vadd.f32 0.0, %v424
  %426 = vmatmul.bf16.gmra.mxu0 %v378
  %v427 = vpop.f32.mrf.mxu0
  %v428 = vadd.f32 0.0, %v427
  %v429 = vpop.f32.mrf.mxu0
  %v430 = vadd.f32 0.0, %v429
  %431 = vmatmul.bf16.gmra.mxu0 %v379
  %v432 = vpop.f32.mrf.mxu0
  %v433 = vadd.f32 0.0, %v432
  %v434 = vpop.f32.mrf.mxu0
  %v435 = vadd.f32 0.0, %v434
  %436 = vdwg.mxu0
  %v437 = vmul.f32 %v398, 1.25
  %v438 = vmul.f32 %v400, 1.25
  %v439 = vmul.f32 %v403, 1.25
  %v440 = vmul.f32 %v405, 1.25
  %v441 = vmul.f32 %v408, 1.25
  %v442 = vmul.f32 %v410, 1.25
  %v443 = vmul.f32 %v413, 1.25
  %v444 = vmul.f32 %v415, 1.25
  %v445 = vmul.f32 %v418, 1.25
  %v446 = vmul.f32 %v420, 1.25
  %v447 = vmul.f32 %v423, 1.25
  %v448 = vmul.f32 %v425, 1.25
  %v449 = vmul.f32 %v428, 1.25
  %v450 = vmul.f32 %v430, 1.25
  %v451 = vmul.f32 %v433, 1.25
  %v452 = vmul.f32 %v435, 1.25
  %v453 = vadd.f32 %v179, %v316
  %v454 = vadd.f32 %v180, %v317
  %v455 = vadd.f32 %v181, %v318
  %v456 = vadd.f32 %v182, %v319
  %v457 = vadd.f32 %v183, %v320
  %v458 = vadd.f32 %v184, %v321
  %v459 = vadd.f32 %v185, %v322
  %v460 = vadd.f32 %v186, %v323
  %v461 = vadd.f32 %v187, %v324
  %v462 = vadd.f32 %v188, %v325
  %v463 = vadd.f32 %v189, %v326
  %v464 = vadd.f32 %v190, %v327
  %v465 = vadd.f32 %v191, %v328
  %v466 = vadd.f32 %v192, %v329
  %v467 = vadd.f32 %v193, %v330
  %v468 = vadd.f32 %v194, %v331
  %v469 = vadd.f32 %v195, %v437
  %v470 = vadd.f32 %v196, %v438
  %v471 = vadd.f32 %v197, %v439
  %v472 = vadd.f32 %v198, %v440
  %v473 = vadd.f32 %v199, %v441
  %v474 = vadd.f32 %v200, %v442
  %v475 = vadd.f32 %v201, %v443
  %v476 = vadd.f32 %v202, %v444
  %v477 = vadd.f32 %v203, %v445
  %v478 = vadd.f32 %v204, %v446
  %v479 = vadd.f32 %v205, %v447
  %v480 = vadd.f32 %v206, %v448
  %v481 = vadd.f32 %v207, %v449
  %v482 = vadd.f32 %v208, %v450
  %v483 = vadd.f32 %v209, %v451
  %v484 = vadd.f32 %v210, %v452
  %v485 = vpack.c.bf16 %v317, %v316
  %v486 = vpack.c.bf16 %v319, %v318
  %v487 = vpack.c.bf16 %v321, %v320
  %v488 = vpack.c.bf16 %v323, %v322
  %v489 = vpack.c.bf16 %v325, %v324
  %v490 = vpack.c.bf16 %v327, %v326
  %v491 = vpack.c.bf16 %v329, %v328
  %v492 = vpack.c.bf16 %v331, %v330
  %493 = vmatpush.bf16.msra.mxu0 %v492
  %494 = vmatpush.bf16.msra.mxu0 %v491
  %495 = vmatpush.bf16.msra.mxu0 %v490
  %496 = vmatpush.bf16.msra.mxu0 %v489
  %497 = vmatpush.bf16.msra.mxu0 %v488
  %498 = vmatpush.bf16.msra.mxu0 %v487
  %499 = vmatpush.bf16.msra.mxu0 %v486
  %500 = vmatpush.bf16.msra.mxu0 %v485
  %501 = vmatmul.bf16.gmra.mxu0 %v251
  %v502 = vpop.f32.mrf.mxu0
  %v503 = vadd.f32 0.0, %v502
  %v504 = vpop.f32.mrf.mxu0
  %v505 = vadd.f32 0.0, %v504
  %506 = vmatmul.bf16.gmra.mxu0 %v252
  %v507 = vpop.f32.mrf.mxu0
  %v508 = vadd.f32 0.0, %v507
  %v509 = vpop.f32.mrf.mxu0
  %v510 = vadd.f32 0.0, %v509
  %511 = vmatmul.bf16.gmra.mxu0 %v253
  %v512 = vpop.f32.mrf.mxu0
  %v513 = vadd.f32 0.0, %v512
  %v514 = vpop.f32.mrf.mxu0
  %v515 = vadd.f32 0.0, %v514
  %516 = vmatmul.bf16.gmra.mxu0 %v254
  %v517 = vpop.f32.mrf.mxu0
  %v518 = vadd.f32 0.0, %v517
  %v519 = vpop.f32.mrf.mxu0
  %v520 = vadd.f32 0.0, %v519
  %521 = vmatmul.bf16.gmra.mxu0 %v255
  %v522 = vpop.f32.mrf.mxu0
  %v523 = vadd.f32 0.0, %v522
  %v524 = vpop.f32.mrf.mxu0
  %v525 = vadd.f32 0.0, %v524
  %526 = vmatmul.bf16.gmra.mxu0 %v256
  %v527 = vpop.f32.mrf.mxu0
  %v528 = vadd.f32 0.0, %v527
  %v529 = vpop.f32.mrf.mxu0
  %v530 = vadd.f32 0.0, %v529
  %531 = vmatmul.bf16.gmra.mxu0 %v257
  %v532 = vpop.f32.mrf.mxu0
  %v533 = vadd.f32 0.0, %v532
  %v534 = vpop.f32.mrf.mxu0
  %v535 = vadd.f32 0.0, %v534
  %536 = vmatmul.bf16.gmra.mxu0 %v258
  %v537 = vpop.f32.mrf.mxu0
  %v538 = vadd.f32 0.0, %v537
  %v539 = vpop.f32.mrf.mxu0
  %v540 = vadd.f32 0.0, %v539
  %541 = vdwg.mxu0
  %v542 = vmul.f32 %v503, 1.25
  %v543 = vmul.f32 %v505, 1.25
  %v544 = vmul.f32 %v508, 1.25
  %v545 = vmul.f32 %v510, 1.25
  %v546 = vmul.f32 %v513, 1.25
  %v547 = vmul.f32 %v515, 1.25
  %v548 = vmul.f32 %v518, 1.25
  %v549 = vmul.f32 %v520, 1.25
  %v550 = vmul.f32 %v523, 1.25
  %v551 = vmul.f32 %v525, 1.25
  %v552 = vmul.f32 %v528, 1.25
  %v553 = vmul.f32 %v530, 1.25
  %v554 = vmul.f32 %v533, 1.25
  %v555 = vmul.f32 %v535, 1.25
  %v556 = vmul.f32 %v538, 1.25
  %v557 = vmul.f32 %v540, 1.25
  %v558 = vpack.c.bf16 %v438, %v437
  %v559 = vpack.c.bf16 %v440, %v439
  %v560 = vpack.c.bf16 %v442, %v441
  %v561 = vpack.c.bf16 %v444, %v443
  %v562 = vpack.c.bf16 %v446, %v445
  %v563 = vpack.c.bf16 %v448, %v447
  %v564 = vpack.c.bf16 %v450, %v449
  %v565 = vpack.c.bf16 %v452, %v451
  %566 = vmatpush.bf16.msra.mxu0 %v565
  %567 = vmatpush.bf16.msra.mxu0 %v564
  %568 = vmatpush.bf16.msra.mxu0 %v563
  %569 = vmatpush.bf16.msra.mxu0 %v562
  %570 = vmatpush.bf16.msra.mxu0 %v561
  %571 = vmatpush.bf16.msra.mxu0 %v560
  %572 = vmatpush.bf16.msra.mxu0 %v559
  %573 = vmatpush.bf16.msra.mxu0 %v558
  %574 = vmatmul.bf16.gmra.mxu0 %v372
  %v575 = vpop.f32.mrf.mxu0
  %v576 = vadd.f32 0.0, %v575
  %v577 = vpop.f32.mrf.mxu0
  %v578 = vadd.f32 0.0, %v577
  %579 = vmatmul.bf16.gmra.mxu0 %v373
  %v580 = vpop.f32.mrf.mxu0
  %v581 = vadd.f32 0.0, %v580
  %v582 = vpop.f32.mrf.mxu0
  %v583 = vadd.f32 0.0, %v582
  %584 = vmatmul.bf16.gmra.mxu0 %v374
  %v585 = vpop.f32.mrf.mxu0
  %v586 = vadd.f32 0.0, %v585
  %v587 = vpop.f32.mrf.mxu0
  %v588 = vadd.f32 0.0, %v587
  %589 = vmatmul.bf16.gmra.mxu0 %v375
  %v590 = vpop.f32.mrf.mxu0
  %v591 = vadd.f32 0.0, %v590
  %v592 = vpop.f32.mrf.mxu0
  %v593 = vadd.f32 0.0, %v592
  %594 = vmatmul.bf16.gmra.mxu0 %v376
  %v595 = vpop.f32.mrf.mxu0
  %v596 = vadd.f32 0.0, %v595
  %v597 = vpop.f32.mrf.mxu0
  %v598 = vadd.f32 0.0, %v597
  %599 = vmatmul.bf16.gmra.mxu0 %v377
  %v600 = vpop.f32.mrf.mxu0
  %v601 = vadd.f32 0.0, %v600
  %v602 = vpop.f32.mrf.mxu0
  %v603 = vadd.f32 0.0, %v602
  %604 = vmatmul.bf16.gmra.mxu0 %v378
  %v605 = vpop.f32.mrf.mxu0
  %v606 = vadd.f32 0.0, %v605
  %v607 = vpop.f32.mrf.mxu0
  %v608 = vadd.f32 0.0, %v607
  %609 = vmatmul.bf16.gmra.mxu0 %v379
  %v610 = vpop.f32.mrf.mxu0
  %v611 = vadd.f32 0.0, %v610
  %v612 = vpop.f32.mrf.mxu0
  %v613 = vadd.f32 0.0, %v612
  %614 = vdwg.mxu0
  %v615 = vmul.f32 %v576, 1.25
  %v616 = vmul.f32 %v578, 1.25
  %v617 = vmul.f32 %v581, 1.25
  %v618 = vmul.f32 %v583, 1.25
  %v619 = vmul.f32 %v586, 1.25
  %v620 = vmul.f32 %v588, 1.25
  %v621 = vmul.f32 %v591, 1.25
  %v622 = vmul.f32 %v593, 1.25
  %v623 = vmul.f32 %v596, 1.25
  %v624 = vmul.f32 %v598, 1.25
  %v625 = vmul.f32 %v601, 1.25
  %v626 = vmul.f32 %v603, 1.25
  %v627 = vmul.f32 %v606, 1.25
  %v628 = vmul.f32 %v608, 1.25
  %v629 = vmul.f32 %v611, 1.25
  %v630 = vmul.f32 %v613, 1.25
  %v631 = vadd.f32 %v453, %v542
  %v632 = vadd.f32 %v454, %v543
  %v633 = vadd.f32 %v455, %v544
  %v634 = vadd.f32 %v456, %v545
  %v635 = vadd.f32 %v457, %v546
  %v636 = vadd.f32 %v458, %v547
  %v637 = vadd.f32 %v459, %v548
  %v638 = vadd.f32 %v460, %v549
  %v639 = vadd.f32 %v461, %v550
  %v640 = vadd.f32 %v462, %v551
  %v641 = vadd.f32 %v463, %v552
  %v642 = vadd.f32 %v464, %v553
  %v643 = vadd.f32 %v465, %v554
  %v644 = vadd.f32 %v466, %v555
  %v645 = vadd.f32 %v467, %v556
  %v646 = vadd.f32 %v468, %v557
  %v647 = vadd.f32 %v469, %v615
  %v648 = vadd.f32 %v470, %v616
  %v649 = vadd.f32 %v471, %v617
  %v650 = vadd.f32 %v472, %v618
  %v651 = vadd.f32 %v473, %v619
  %v652 = vadd.f32 %v474, %v620
  %v653 = vadd.f32 %v475, %v621
  %v654 = vadd.f32 %v476, %v622
  %v655 = vadd.f32 %v477, %v623
  %v656 = vadd.f32 %v478, %v624
  %v657 = vadd.f32 %v479, %v625
  %v658 = vadd.f32 %v480, %v626
  %v659 = vadd.f32 %v481, %v627
  %v660 = vadd.f32 %v482, %v628
  %v661 = vadd.f32 %v483, %v629
  %v662 = vadd.f32 %v484, %v630
  %v663 = vmul.f32 %v631, 0.33333334
  %v664 = vmul.f32 %v632, 0.33333334
  %v665 = vmul.f32 %v633, 0.33333334
  %v666 = vmul.f32 %v634, 0.33333334
  %v667 = vmul.f32 %v635, 0.33333334
  %v668 = vmul.f32 %v636, 0.33333334
  %v669 = vmul.f32 %v637, 0.33333334
  %v670 = vmul.f32 %v638, 0.33333334
  %v671 = vmul.f32 %v639, 0.33333334
  %v672 = vmul.f32 %v640, 0.33333334
  %v673 = vmul.f32 %v641, 0.33333334
  %v674 = vmul.f32 %v642, 0.33333334
  %v675 = vmul.f32 %v643, 0.33333334
  %v676 = vmul.f32 %v644, 0.33333334
  %v677 = vmul.f32 %v645, 0.33333334
  %v678 = vmul.f32 %v646, 0.33333334
  %679 = vst [vmem:[%s3] sm:$0xff] %v663
  %680 = vst [vmem:[%s3 + $0x10] sm:$0xff] %v664
  %681 = vst [vmem:[%s3 + $0x20] sm:$0xff] %v665
  %682 = vst [vmem:[%s3 + $0x30] sm:$0xff] %v666
  %683 = vst [vmem:[%s3 + $0x40] sm:$0xff] %v667
  %684 = vst [vmem:[%s3 + $0x50] sm:$0xff] %v668
  %685 = vst [vmem:[%s3 + $0x60] sm:$0xff] %v669
  %686 = vst [vmem:[%s3 + $0x70] sm:$0xff] %v670
  %687 = vst [vmem:[%s3 + $0x80] sm:$0xff] %v671
  %688 = vst [vmem:[%s3 + $0x90] sm:$0xff] %v672
  %689 = vst [vmem:[%s3 + $0xa0] sm:$0xff] %v673
  %690 = vst [vmem:[%s3 + $0xb0] sm:$0xff] %v674
  %691 = vst [vmem:[%s3 + $0xc0] sm:$0xff] %v675
  %692 = vst [vmem:[%s3 + $0xd0] sm:$0xff] %v676
  %693 = vst [vmem:[%s3 + $0xe0] sm:$0xff] %v677
  %694 = vst [vmem:[%s3 + $0xf0] sm:$0xff] %v678
  %v695 = vmul.f32 %v647, 0.33333334
  %v696 = vmul.f32 %v648, 0.33333334
  %v697 = vmul.f32 %v649, 0.33333334
  %v698 = vmul.f32 %v650, 0.33333334
  %v699 = vmul.f32 %v651, 0.33333334
  %v700 = vmul.f32 %v652, 0.33333334
  %v701 = vmul.f32 %v653, 0.33333334
  %v702 = vmul.f32 %v654, 0.33333334
  %v703 = vmul.f32 %v655, 0.33333334
  %v704 = vmul.f32 %v656, 0.33333334
  %v705 = vmul.f32 %v657, 0.33333334
  %v706 = vmul.f32 %v658, 0.33333334
  %v707 = vmul.f32 %v659, 0.33333334
  %v708 = vmul.f32 %v660, 0.33333334
  %v709 = vmul.f32 %v661, 0.33333334
  %v710 = vmul.f32 %v662, 0.33333334
  %711 = vst [vmem:[%s3 + $0x8] sm:$0xff] %v695
  %712 = vst [vmem:[%s3 + $0x18] sm:$0xff] %v696
  %713 = vst [vmem:[%s3 + $0x28] sm:$0xff] %v697
  %714 = vst [vmem:[%s3 + $0x38] sm:$0xff] %v698
  %715 = vst [vmem:[%s3 + $0x48] sm:$0xff] %v699
  %716 = vst [vmem:[%s3 + $0x58] sm:$0xff] %v700
  %717 = vst [vmem:[%s3 + $0x68] sm:$0xff] %v701
  %718 = vst [vmem:[%s3 + $0x78] sm:$0xff] %v702
  %719 = vst [vmem:[%s3 + $0x88] sm:$0xff] %v703
  %720 = vst [vmem:[%s3 + $0x98] sm:$0xff] %v704
  %721 = vst [vmem:[%s3 + $0xa8] sm:$0xff] %v705
  %722 = vst [vmem:[%s3 + $0xb8] sm:$0xff] %v706
  %723 = vst [vmem:[%s3 + $0xc8] sm:$0xff] %v707
  %724 = vst [vmem:[%s3 + $0xd8] sm:$0xff] %v708
  %725 = vst [vmem:[%s3 + $0xe8] sm:$0xff] %v709
  %726 = vst [vmem:[%s3 + $0xf8] sm:$0xff] %v710
  // Predicated region
  $region14: #{adv_drop_forward.1} parent=0 // pred_check
    _
  $region15: #{adv_drop_forward.1} parent=0 // pred_check_branch
    %728 = sbr.rel (0) target = $region17
  $region16: #{adv_drop_forward.1} parent=0 // pred_region
    _
  $region17: #{adv_drop_forward.1} parent=0 // pred_fallthru
    _
  // Predicated region
  $region18: #{adv_drop_forward.1} parent=0 // pred_check
    _
  $region19: #{adv_drop_forward.1} parent=0 // pred_check_branch
    %730 = sbr.rel (0) target = $region21
  $region20: #{adv_drop_forward.1} parent=0 // pred_region
    _
  $region21: #{adv_drop_forward.1} parent=0 // pred_fallthru
    _

</llo_original>
